<compile_context>
chip_gen: v5e
topology: v5e:2x2
jax: 0.10.0
libtpu: 0.0.40
codegen_flags: <defaults>
</compile_context>

<pallas_src>
import functools

import jax
import jax.numpy as jnp
from jax.experimental import pallas as pl
from jax.experimental.pallas import tpu as pltpu

# ------------------------- model hyper-parameters --------------------------
NUM_FEATS = 32      # per-hop feature dim F
NUM_HOPS  = 3       # xs last dim = NUM_HOPS * NUM_FEATS
HIDDEN    = 32      # JK reference hidden dim
N_CLASSES = 8       # output classes
N_NODES   = 16      # number of nodes

SEG        = 128    # lane segment width (one f32 vreg of lanes)
SCORE_OFF  = SEG // 2   # lane offset of the replicated score region in `comb`
MAX_TILE_N = 1024   # node-tile cap


def _round_up(x, m):
    return ((x + m - 1) // m) * m


def _cdiv(a, b):
    return -(-a // b)


# ------------------------------- kernel ------------------------------------
def gamlp_kernel(x0_ref, xe_ref, w0_ref, w1_ref, wsc_ref, fold_ref,
                 bjk_ref, bsc_ref, bout_ref, alpha_ref, out_ref,
                 *, num_hops, n_classes):
    # One accumulated matmul output with a unified column layout:
    #   t lanes [0, SEG)      : xs @ W_jk                  (hidden in lanes 0..HIDDEN-1)
    #   t lanes [SEG, 2*SEG)  : "comb" segment
    #     comb lanes h*C .. h*C+C-1              : x_h @ W_out       (hop-h projection)
    #     comb lanes SCORE_OFF+h*C .. +h*C+C-1   : x_h . w_att_x     (replicated C times)
    t = (jnp.dot(x0_ref[...], w0_ref[...], preferred_element_type=jnp.float32)
         + jnp.dot(xe_ref[...], w1_ref[...], preferred_element_type=jnp.float32))

    # ---- JK reference vector: PReLU(xs @ W_jk + b_jk)
    jk = t[:, 0:SEG] + bjk_ref[...]
    jk = jnp.where(jk > 0, jk, alpha_ref[...] * jk)     # single-parameter PReLU

    comb = t[:, SEG:2 * SEG]

    # ---- per-hop sigmoid attention scores (replicated C lanes per hop)
    sc = jax.nn.sigmoid(
        jnp.dot(jk.astype(wsc_ref.dtype), wsc_ref[...],
                preferred_element_type=jnp.float32)
        + comb + bsc_ref[...])

    # masked "softmax" over hops: sigmoid output is bounded in (0,1) so no
    # max-subtraction is needed; the divide goes to the EUP slot.
    col = jax.lax.broadcasted_iota(jnp.int32, sc.shape, 1)
    in_score = jnp.logical_and(col >= SCORE_OFF,
                               col < SCORE_OFF + num_hops * n_classes)
    e = jnp.where(in_score, jnp.exp(sc), 0.0)
    denom = jnp.sum(e, axis=-1, keepdims=True)          # = C * sum_h exp(sc_h)
    w_rep = e * (float(n_classes) * pl.reciprocal(denom, approx=True))

    # Align replicated hop weights onto the projection lanes (SCORE_OFF == SEG/2,
    # so the 64-lane rotation is identical in either direction), weight the
    # projections, then fold the per-hop C-lane groups into lanes 0..C-1 with a
    # tiny 0/1 matmul (layout-safe; MXU has slack).
    w_aligned = pltpu.roll(w_rep, SEG - SCORE_OFF, 1)   # == roll by SCORE_OFF
    prod = comb * w_aligned                             # zero outside lanes [0, H*C)
    out = jnp.dot(prod, fold_ref[...], preferred_element_type=jnp.float32)
    out = out + bout_ref[...]

    out_ref[...] = out[:, 0:n_classes].astype(out_ref.dtype)


# --------------------------- weight packing ---------------------------------
def _pack_params(params, *, num_hops, feat, hidden, n_classes):
    """Pack raw GAMLP weights into the unified lane-aligned layout (one-time)."""
    assert hidden <= SEG
    assert num_hops * n_classes <= SCORE_OFF
    assert SCORE_OFF + num_hops * n_classes <= SEG

    w_jk  = params["w_jk"].astype(jnp.float32)     # [H*F, hidden]
    b_jk  = params["b_jk"].astype(jnp.float32)     # [1, hidden]
    alpha = params["alpha"].astype(jnp.float32)    # [1, 1]
    w_att = params["w_att"].astype(jnp.float32)    # [hidden+F, 1]
    b_att = params["b_att"].astype(jnp.float32)    # [1, 1]
    w_out = params["w_out"].astype(jnp.float32)    # [F, C]
    b_out = params["b_out"].astype(jnp.float32)    # [1, C]

    w_att_jk = w_att[:hidden, 0]                   # [hidden]
    w_att_x  = w_att[hidden:, 0]                   # [F]
    w_att_x_rep = jnp.tile(w_att_x[:, None], (1, n_classes))   # [F, C]

    # x0 carries hop 0; x_emb carries hops 1..H-1.  Both share column meaning.
    w0 = jnp.zeros((feat, 2 * SEG), jnp.float32)
    w0 = w0.at[:, :hidden].set(w_jk[:feat])
    w0 = w0.at[:, SEG:SEG + n_classes].set(w_out)
    w0 = w0.at[:, SEG + SCORE_OFF:SEG + SCORE_OFF + n_classes].set(w_att_x_rep)

    w1 = jnp.zeros(((num_hops - 1) * feat, 2 * SEG), jnp.float32)
    w1 = w1.at[:, :hidden].set(w_jk[feat:])
    for h in range(1, num_hops):
        rs = (h - 1) * feat
        w1 = w1.at[rs:rs + feat,
                   SEG + h * n_classes:SEG + (h + 1) * n_classes].set(w_out)
        w1 = w1.at[rs:rs + feat,
                   SEG + SCORE_OFF + h * n_classes:
                   SEG + SCORE_OFF + (h + 1) * n_classes].set(w_att_x_rep)

    # jk -> score weights: replicated across the C lanes of every hop group.
    wsc = jnp.zeros((SEG, SEG), jnp.float32)
    wsc = wsc.at[:hidden, SCORE_OFF:SCORE_OFF + num_hops * n_classes].set(
        jnp.tile(w_att_jk[:, None], (1, num_hops * n_classes)))

    # fold matrix: prod lane h*C + c contributes to output class c.
    fold = jnp.zeros((SEG, SEG), jnp.float32)
    eye_c = jnp.eye(n_classes, dtype=jnp.float32)
    for h in range(num_hops):
        fold = fold.at[h * n_classes:(h + 1) * n_classes, :n_classes].set(eye_c)

    bjk = jnp.zeros((1, SEG), jnp.float32).at[:, :hidden].set(b_jk)
    bsc = jnp.zeros((1, SEG), jnp.float32).at[
        :, SCORE_OFF:SCORE_OFF + num_hops * n_classes].set(b_att[0, 0])
    bout = jnp.zeros((1, SEG), jnp.float32).at[:, :n_classes].set(b_out)
    alpha_row = jnp.full((1, SEG), alpha[0, 0], jnp.float32)

    return (w0.astype(jnp.bfloat16), w1.astype(jnp.bfloat16),
            wsc.astype(jnp.bfloat16), fold, bjk, bsc, bout, alpha_row)


# ------------------------------- wrapper ------------------------------------
def gamlp_forward(x0, x_emb, params):
    """x0: [N, F], x_emb: [N, (H-1)*F]  ->  logits [N, C]."""
    n, feat = x0.shape
    assert feat == NUM_FEATS
    assert x_emb.shape == (n, (NUM_HOPS - 1) * NUM_FEATS)

    (w0, w1, wsc, fold, bjk, bsc, bout, alpha_row) = _pack_params(
        params, num_hops=NUM_HOPS, feat=NUM_FEATS, hidden=HIDDEN,
        n_classes=N_CLASSES)

    # Node tiling: small N -> single tile (grid=1); large N -> >=2 (even) grid
    # steps so both v7x TensorCores get work, tiles capped at MAX_TILE_N rows.
    n16 = _round_up(n, 16)                 # bf16 sublane packing
    if n16 < 512:
        tile_n = n16
    else:
        num_tiles = max(2, _cdiv(n16, MAX_TILE_N))
        if num_tiles % 2:
            num_tiles += 1                 # even step count for 2 TCs (v7x)
        tile_n = _round_up(_cdiv(n16, num_tiles), 16)
    n_pad = _round_up(n16, tile_n)

    x0 = x0.astype(jnp.bfloat16)
    x_emb = x_emb.astype(jnp.bfloat16)
    if n_pad != n:
        x0 = jnp.pad(x0, ((0, n_pad - n), (0, 0)))
        x_emb = jnp.pad(x_emb, ((0, n_pad - n), (0, 0)))

    kern = functools.partial(gamlp_kernel, num_hops=NUM_HOPS,
                             n_classes=N_CLASSES)
    full = lambda i: (0, 0)   # weight / bias blocks are resident across grid

    out = pl.pallas_call(
        kern,
        out_shape=jax.ShapeDtypeStruct((n_pad, N_CLASSES), jnp.float32),
        grid_spec=pltpu.PrefetchScalarGridSpec(
            num_scalar_prefetch=0,
            grid=(n_pad // tile_n,),
            in_specs=[
                pl.BlockSpec((tile_n, NUM_FEATS), lambda i: (i, 0)),            # x0
                pl.BlockSpec((tile_n, (NUM_HOPS - 1) * NUM_FEATS),
                             lambda i: (i, 0)),                                  # x_emb
                pl.BlockSpec(w0.shape, full),          # [F, 2*SEG]      bf16
                pl.BlockSpec(w1.shape, full),          # [(H-1)*F, 2*SEG] bf16
                pl.BlockSpec(wsc.shape, full),         # [SEG, SEG]      bf16
                pl.BlockSpec(fold.shape, full),        # [SEG, SEG]      f32
                pl.BlockSpec(bjk.shape, full),         # [1, SEG]
                pl.BlockSpec(bsc.shape, full),         # [1, SEG]
                pl.BlockSpec(bout.shape, full),        # [1, SEG]
                pl.BlockSpec(alpha_row.shape, full),   # [1, SEG]
            ],
            out_specs=pl.BlockSpec((tile_n, N_CLASSES), lambda i: (i, 0)),
        ),
        compiler_params=pltpu.CompilerParams(
            dimension_semantics=("parallel",),
            vmem_limit_bytes=32 * 1024 * 1024),
    )(x0, x_emb, w0, w1, wsc, fold, bjk, bsc, bout, alpha_row)

    return out if n_pad == n else out[:n]


# --------------------------- pure-JAX reference ------------------------------
def gamlp_reference(x0, x_emb, params):
    xs = jnp.concatenate([x0, x_emb], axis=-1)
    jk = xs @ params["w_jk"] + params["b_jk"]
    a = params["alpha"][0, 0]
    jk = jnp.where(jk > 0, jk, a * jk)
    w_att_jk = params["w_att"][:HIDDEN, :]
    w_att_x = params["w_att"][HIDDEN:, :]
    scores = []
    for h in range(NUM_HOPS):
        xh = xs[:, h * NUM_FEATS:(h + 1) * NUM_FEATS]
        scores.append(jax.nn.sigmoid(jk @ w_att_jk + xh @ w_att_x
                                     + params["b_att"][0, 0]))
    w_hop = jax.nn.softmax(jnp.concatenate(scores, axis=-1), axis=-1)
    agg = sum(xs[:, h * NUM_FEATS:(h + 1) * NUM_FEATS] * w_hop[:, h:h + 1]
              for h in range(NUM_HOPS))
    return agg @ params["w_out"] + params["b_out"]


# --------------------------------- main --------------------------------------
if __name__ == "__main__":
    key = jax.random.PRNGKey(0)
    ks = jax.random.split(key, 8)

    x0 = jax.random.normal(ks[0], (N_NODES, NUM_FEATS), jnp.float32)
    x_emb = jax.random.normal(ks[1], (N_NODES, (NUM_HOPS - 1) * NUM_FEATS),
                              jnp.float32)

    params = {
        "w_jk":  0.05 * jax.random.normal(ks[2], (NUM_HOPS * NUM_FEATS, HIDDEN),
                                          jnp.float32),
        "b_jk":  jnp.zeros((1, HIDDEN), jnp.float32),
        "alpha": jnp.full((1, 1), 0.25, jnp.float32),          # PReLU default
        "w_att": 0.05 * jax.random.normal(ks[3], (HIDDEN + NUM_FEATS, 1),
                                          jnp.float32),
        "b_att": jnp.zeros((1, 1), jnp.float32),
        "w_out": 0.05 * jax.random.normal(ks[4], (NUM_FEATS, N_CLASSES),
                                          jnp.float32),
        "b_out": jnp.zeros((1, N_CLASSES), jnp.float32),
    }

    out = gamlp_forward(x0, x_emb, params)
    out = jax.block_until_ready(out)

    ref = gamlp_reference(x0, x_emb, params)
    assert out.shape == (N_NODES, N_CLASSES)
    # bf16 matmul path -> looser tolerance than the f32 reference
    assert jnp.allclose(out, ref, atol=2e-2, rtol=2e-2), "mismatch vs reference"

    print("KERNEL_OK")
</pallas_src>

<mosaic_0001>
module attributes {stable_mosaic.version = 11 : i64} {
  func.func @gamlp_kernel(%arg0: i32, %arg1: memref<16x32xbf16, #tpu.memory_space<vmem>>, %arg2: memref<16x64xbf16, #tpu.memory_space<vmem>>, %arg3: memref<32x256xbf16, #tpu.memory_space<vmem>>, %arg4: memref<64x256xbf16, #tpu.memory_space<vmem>>, %arg5: memref<128x128xbf16, #tpu.memory_space<vmem>>, %arg6: memref<128x128xf32, #tpu.memory_space<vmem>>, %arg7: memref<1x128xf32, #tpu.memory_space<vmem>>, %arg8: memref<1x128xf32, #tpu.memory_space<vmem>>, %arg9: memref<1x128xf32, #tpu.memory_space<vmem>>, %arg10: memref<1x128xf32, #tpu.memory_space<vmem>>, %arg11: memref<16x8xf32, #tpu.memory_space<vmem>>) attributes {dimension_semantics = [#tpu.dimension_semantics<parallel>], iteration_bounds = array<i64: 1>, scalar_prefetch = 0 : i64, scratch_operands = 0 : i64, tpu.core_type = #tpu.core_type<tc>, window_params = [{transform_indices = @transform_0, window_bounds = array<i64: 16, 32>}, {transform_indices = @transform_1, window_bounds = array<i64: 16, 64>}, {pipeline_mode = #tpu.pipeline_mode<synchronous>, transform_indices = @transform_2, window_bounds = array<i64: 32, 256>}, {pipeline_mode = #tpu.pipeline_mode<synchronous>, transform_indices = @transform_3, window_bounds = array<i64: 64, 256>}, {pipeline_mode = #tpu.pipeline_mode<synchronous>, transform_indices = @transform_4, window_bounds = array<i64: 128, 128>}, {pipeline_mode = #tpu.pipeline_mode<synchronous>, transform_indices = @transform_5, window_bounds = array<i64: 128, 128>}, {pipeline_mode = #tpu.pipeline_mode<synchronous>, transform_indices = @transform_6, window_bounds = array<i64: 1, 128>}, {pipeline_mode = #tpu.pipeline_mode<synchronous>, transform_indices = @transform_7, window_bounds = array<i64: 1, 128>}, {pipeline_mode = #tpu.pipeline_mode<synchronous>, transform_indices = @transform_8, window_bounds = array<i64: 1, 128>}, {pipeline_mode = #tpu.pipeline_mode<synchronous>, transform_indices = @transform_9, window_bounds = array<i64: 1, 128>}, {transform_indices = @transform_10, window_bounds = array<i64: 16, 8>}]} {
    %c0 = arith.constant 0 : index
    %c0_0 = arith.constant 0 : index
    %0 = vector.load %arg1[%c0, %c0_0] : memref<16x32xbf16, #tpu.memory_space<vmem>>, vector<16x32xbf16>
    %c0_1 = arith.constant 0 : index
    %c0_2 = arith.constant 0 : index
    %1 = vector.load %arg3[%c0_1, %c0_2] : memref<32x256xbf16, #tpu.memory_space<vmem>>, vector<32x256xbf16>
    %cst = arith.constant dense<0.000000e+00> : vector<16x256xf32>
    %2 = tpu.matmul %0, %1, %cst {dimension_numbers = #tpu.dot_dimension_numbers<[1], [0], [0], [1], [0, 0, 1, 1], [], []>} : vector<16x32xbf16>, vector<32x256xbf16>, vector<16x256xf32> -> vector<16x256xf32>
    %c0_3 = arith.constant 0 : index
    %c0_4 = arith.constant 0 : index
    %3 = vector.load %arg2[%c0_3, %c0_4] : memref<16x64xbf16, #tpu.memory_space<vmem>>, vector<16x64xbf16>
    %c0_5 = arith.constant 0 : index
    %c0_6 = arith.constant 0 : index
    %4 = vector.load %arg4[%c0_5, %c0_6] : memref<64x256xbf16, #tpu.memory_space<vmem>>, vector<64x256xbf16>
    %cst_7 = arith.constant dense<0.000000e+00> : vector<16x256xf32>
    %5 = tpu.matmul %3, %4, %cst_7 {dimension_numbers = #tpu.dot_dimension_numbers<[1], [0], [0], [1], [0, 0, 1, 1], [], []>} : vector<16x64xbf16>, vector<64x256xbf16>, vector<16x256xf32> -> vector<16x256xf32>
    %6 = arith.addf %2, %5 : vector<16x256xf32>
    %7 = vector.extract_strided_slice %6 {offsets = [0, 0], sizes = [16, 128], strides = [1, 1]} : vector<16x256xf32> to vector<16x128xf32>
    %c0_8 = arith.constant 0 : index
    %c0_9 = arith.constant 0 : index
    %8 = vector.load %arg7[%c0_8, %c0_9] : memref<1x128xf32, #tpu.memory_space<vmem>>, vector<1x128xf32>
    %9 = vector.broadcast %8 : vector<1x128xf32> to vector<16x128xf32>
    %10 = arith.addf %7, %9 : vector<16x128xf32>
    %cst_10 = arith.constant 0.000000e+00 : f32
    %11 = vector.broadcast %cst_10 : f32 to vector<16x128xf32>
    %12 = arith.cmpf ogt, %10, %11 : vector<16x128xf32>
    %c0_11 = arith.constant 0 : index
    %c0_12 = arith.constant 0 : index
    %13 = vector.load %arg10[%c0_11, %c0_12] : memref<1x128xf32, #tpu.memory_space<vmem>>, vector<1x128xf32>
    %14 = vector.broadcast %13 : vector<1x128xf32> to vector<16x128xf32>
    %15 = arith.mulf %14, %10 : vector<16x128xf32>
    %16 = arith.select %12, %10, %15 : vector<16x128xi1>, vector<16x128xf32>
    %17 = vector.extract_strided_slice %6 {offsets = [0, 128], sizes = [16, 128], strides = [1, 1]} : vector<16x256xf32> to vector<16x128xf32>
    %18 = arith.truncf %16 : vector<16x128xf32> to vector<16x128xbf16>
    %c0_13 = arith.constant 0 : index
    %c0_14 = arith.constant 0 : index
    %19 = vector.load %arg5[%c0_13, %c0_14] : memref<128x128xbf16, #tpu.memory_space<vmem>>, vector<128x128xbf16>
    %cst_15 = arith.constant dense<0.000000e+00> : vector<16x128xf32>
    %20 = tpu.matmul %18, %19, %cst_15 {dimension_numbers = #tpu.dot_dimension_numbers<[1], [0], [0], [1], [0, 0, 1, 1], [], []>} : vector<16x128xbf16>, vector<128x128xbf16>, vector<16x128xf32> -> vector<16x128xf32>
    %21 = arith.addf %20, %17 : vector<16x128xf32>
    %c0_16 = arith.constant 0 : index
    %c0_17 = arith.constant 0 : index
    %22 = vector.load %arg8[%c0_16, %c0_17] : memref<1x128xf32, #tpu.memory_space<vmem>>, vector<1x128xf32>
    %23 = vector.broadcast %22 : vector<1x128xf32> to vector<16x128xf32>
    %24 = arith.addf %21, %23 : vector<16x128xf32>
    %25 = arith.negf %24 : vector<16x128xf32>
    %26 = math.exp %25 : vector<16x128xf32>
    %cst_18 = arith.constant 1.000000e+00 : f32
    %27 = vector.broadcast %cst_18 : f32 to vector<16x128xf32>
    %28 = arith.addf %27, %26 : vector<16x128xf32>
    %29 = arith.divf %27, %28 : vector<16x128xf32>
    %30 = tpu.iota {dimensions = array<i32: 1>} : vector<16x128xi32>
    %c64_i32 = arith.constant 64 : i32
    %31 = vector.broadcast %c64_i32 : i32 to vector<16x128xi32>
    %32 = arith.cmpi sge, %30, %31 : vector<16x128xi32>
    %c88_i32 = arith.constant 88 : i32
    %33 = vector.broadcast %c88_i32 : i32 to vector<16x128xi32>
    %34 = arith.cmpi slt, %30, %33 : vector<16x128xi32>
    %35 = arith.andi %32, %34 : vector<16x128xi1>
    %36 = math.exp %29 : vector<16x128xf32>
    %cst_19 = arith.constant 0.000000e+00 : f32
    %37 = vector.broadcast %cst_19 : f32 to vector<16x128xf32>
    %38 = arith.select %35, %36, %37 : vector<16x128xi1>, vector<16x128xf32>
    %cst_20 = arith.constant dense<0.000000e+00> : vector<16xf32>
    %39 = vector.multi_reduction <add>, %38, %cst_20 [1] : vector<16x128xf32> to vector<16xf32>
    %40 = vector.shape_cast %39 : vector<16xf32> to vector<16x1xf32>
    %41 = tpu.reciprocal %40 {approx = true} : vector<16x1xf32> -> vector<16x1xf32>
    %cst_21 = arith.constant 8.000000e+00 : f32
    %42 = vector.broadcast %cst_21 : f32 to vector<16x1xf32>
    %43 = arith.mulf %42, %41 : vector<16x1xf32>
    %44 = vector.broadcast %43 : vector<16x1xf32> to vector<16x128xf32>
    %45 = arith.mulf %38, %44 : vector<16x128xf32>
    %c64_i32_22 = arith.constant 64 : i32
    %46 = tpu.dynamic_rotate %45 by %c64_i32_22 dim 1 : vector<16x128xf32>, i32 -> vector<16x128xf32>
    %47 = arith.mulf %17, %46 : vector<16x128xf32>
    %c0_23 = arith.constant 0 : index
    %c0_24 = arith.constant 0 : index
    %48 = vector.load %arg6[%c0_23, %c0_24] : memref<128x128xf32, #tpu.memory_space<vmem>>, vector<128x128xf32>
    %cst_25 = arith.constant dense<0.000000e+00> : vector<16x128xf32>
    %49 = tpu.matmul %47, %48, %cst_25 {dimension_numbers = #tpu.dot_dimension_numbers<[1], [0], [0], [1], [0, 0, 1, 1], [], []>} : vector<16x128xf32>, vector<128x128xf32>, vector<16x128xf32> -> vector<16x128xf32>
    %c0_26 = arith.constant 0 : index
    %c0_27 = arith.constant 0 : index
    %50 = vector.load %arg9[%c0_26, %c0_27] : memref<1x128xf32, #tpu.memory_space<vmem>>, vector<1x128xf32>
    %51 = vector.broadcast %50 : vector<1x128xf32> to vector<16x128xf32>
    %52 = arith.addf %49, %51 : vector<16x128xf32>
    %53 = vector.extract_strided_slice %52 {offsets = [0, 0], sizes = [16, 8], strides = [1, 1]} : vector<16x128xf32> to vector<16x8xf32>
    %c0_28 = arith.constant 0 : index
    %c0_29 = arith.constant 0 : index
    %54 = vector.load %arg11[%c0_28, %c0_29] : memref<16x8xf32, #tpu.memory_space<vmem>>, vector<16x8xf32>
    tpu.vector_store %arg11[%c0_28, %c0_29], %53 {strides = array<i32>} : memref<16x8xf32, #tpu.memory_space<vmem>>, vector<16x8xf32>,
    return
  }
  func.func @transform_0(%arg0: i32) -> (i32, i32) {
    %c0_i32 = arith.constant 0 : i32
    %c0_i32_0 = arith.constant 0 : i32
    return %arg0, %c0_i32 : i32, i32
  }
  func.func @transform_1(%arg0: i32) -> (i32, i32) {
    %c0_i32 = arith.constant 0 : i32
    %c0_i32_0 = arith.constant 0 : i32
    return %arg0, %c0_i32 : i32, i32
  }
  func.func @transform_2(%arg0: i32) -> (i32, i32) {
    %c0_i32 = arith.constant 0 : i32
    %c0_i32_0 = arith.constant 0 : i32
    %c0_i32_1 = arith.constant 0 : i32
    return %c0_i32, %c0_i32_0 : i32, i32
  }
  func.func @transform_3(%arg0: i32) -> (i32, i32) {
    %c0_i32 = arith.constant 0 : i32
    %c0_i32_0 = arith.constant 0 : i32
    %c0_i32_1 = arith.constant 0 : i32
    return %c0_i32, %c0_i32_0 : i32, i32
  }
  func.func @transform_4(%arg0: i32) -> (i32, i32) {
    %c0_i32 = arith.constant 0 : i32
    %c0_i32_0 = arith.constant 0 : i32
    %c0_i32_1 = arith.constant 0 : i32
    return %c0_i32, %c0_i32_0 : i32, i32
  }
  func.func @transform_5(%arg0: i32) -> (i32, i32) {
    %c0_i32 = arith.constant 0 : i32
    %c0_i32_0 = arith.constant 0 : i32
    %c0_i32_1 = arith.constant 0 : i32
    return %c0_i32, %c0_i32_0 : i32, i32
  }
  func.func @transform_6(%arg0: i32) -> (i32, i32) {
    %c0_i32 = arith.constant 0 : i32
    %c0_i32_0 = arith.constant 0 : i32
    %c0_i32_1 = arith.constant 0 : i32
    return %c0_i32, %c0_i32_0 : i32, i32
  }
  func.func @transform_7(%arg0: i32) -> (i32, i32) {
    %c0_i32 = arith.constant 0 : i32
    %c0_i32_0 = arith.constant 0 : i32
    %c0_i32_1 = arith.constant 0 : i32
    return %c0_i32, %c0_i32_0 : i32, i32
  }
  func.func @transform_8(%arg0: i32) -> (i32, i32) {
    %c0_i32 = arith.constant 0 : i32
    %c0_i32_0 = arith.constant 0 : i32
    %c0_i32_1 = arith.constant 0 : i32
    return %c0_i32, %c0_i32_0 : i32, i32
  }
  func.func @transform_9(%arg0: i32) -> (i32, i32) {
    %c0_i32 = arith.constant 0 : i32
    %c0_i32_0 = arith.constant 0 : i32
    %c0_i32_1 = arith.constant 0 : i32
    return %c0_i32, %c0_i32_0 : i32, i32
  }
  func.func @transform_10(%arg0: i32) -> (i32, i32) {
    %c0_i32 = arith.constant 0 : i32
    %c0_i32_0 = arith.constant 0 : i32
    return %arg0, %c0_i32 : i32, i32
  }
}

</mosaic_0001>

<llo_original>
// kernel: tpu_custom_call.1
$region0: #{tpu_custom_call.1}
  #allocation0 [shape = 'u32[]', space=smem, size = 0x4, offset = 0x4, fixed_abs, tag = 'smem constant byte address 0x4 - core index']
  #allocation1 [shape = 'u32[72,128]{1,0:T(1,128)}', space=vmem, size = 0x9000, scoped, tag = 'internal scratch']
  %s0 = inlined_call_operand.hbm [shape: bf16[16,32], index: 0, kind: input, shape index: {}]
  %s1 = inlined_call_operand.hbm [shape: bf16[16,64], index: 1, kind: input, shape index: {}]
  %s2 = inlined_call_operand.hbm [shape: bf16[32,256], index: 2, kind: input, shape index: {}]
  %s3 = inlined_call_operand.hbm [shape: bf16[64,256], index: 3, kind: input, shape index: {}]
  %s4 = inlined_call_operand.hbm [shape: bf16[128,128], index: 4, kind: input, shape index: {}]
  %s5 = inlined_call_operand.hbm [shape: f32[128,128], index: 5, kind: input, shape index: {}]
  %s6 = inlined_call_operand.vmem [shape: f32[1,128], index: 6, kind: input, shape index: {}]
  %s7 = inlined_call_operand.vmem [shape: f32[1,128], index: 7, kind: input, shape index: {}]
  %s8 = inlined_call_operand.vmem [shape: f32[1,128], index: 8, kind: input, shape index: {}]
  %s9 = inlined_call_operand.vmem [shape: f32[1,128], index: 9, kind: input, shape index: {}]
  %s10 = inlined_call_operand.vmem [shape: f32[16,8], index: 10, kind: output, shape index: {}]
  %s11 = sld [smem:[#allocation0]]
  $region74: #{tpu_custom_call.1} parent=0
    _
  %s13 = ssub.s32 1, %s11
  %s14 = scalar_select 0, %s13, %s11
  $region1: #{tpu_custom_call.1} parent=0
    #allocation2 [shape = 'u8[4096]{0}', space=vmem, size = 0x1000, scoped, tag = 'input window, operand 0, single buffered']
    #allocation3 [shape = 's32[1]{0}', space=sflag, size = 0x4, scoped, tag = 'scoped memory for tpu_custom_call.1']
    #allocation4 [shape = 'u8[4096]{0}', space=vmem, size = 0x1000, scoped, tag = 'input window, operand 1, single buffered']
    #allocation5 [shape = 's32[1]{0}', space=sflag, size = 0x4, scoped, tag = 'scoped memory for tpu_custom_call.1']
    #allocation6 [shape = 'u8[16384]{0}', space=vmem, size = 0x4000, scoped, tag = 'input window, operand 2, single buffered']
    #allocation7 [shape = 'u8[32768]{0}', space=vmem, size = 0x8000, scoped, tag = 'input window, operand 3, single buffered']
    #allocation8 [shape = 's32[1]{0}', space=sflag, size = 0x4, scoped, tag = 'scoped memory for tpu_custom_call.1']
    #allocation9 [shape = 'u8[32768]{0}', space=vmem, size = 0x8000, scoped, tag = 'input window, operand 4, single buffered']
    #allocation10 [shape = 'u8[65536]{0}', space=vmem, size = 0x10000, scoped, tag = 'input window, operand 5, single buffered']
    #allocation11 [shape = 's32[1]{0}', space=sflag, size = 0x4, scoped, tag = 'scoped memory for tpu_custom_call.1']
    %15 = vsyncpa [#allocation3], 0
    %16 = vsyncpa [#allocation5], 0
    %17 = vsyncpa [#allocation8], 0
    %18 = vsyncpa [#allocation11], 0
    // Predicated region
    $region2: #{tpu_custom_call.1} parent=1 // pred_check
      _
    $region3: #{tpu_custom_call.1} parent=1 // pred_check_branch
      %20 = sbr.rel (0) target = $region5
    $region4: #{tpu_custom_call.1} parent=1 // pred_region
      %22 = vsyncadd [#allocation3], 0
      %s23 = sshll.u32 %s0, 4
      %s24 = int_to_ptr.hbm [resolvable:$true] %s23
      %s25 = sshll.u32 [#allocation2], 4
      %s26 = int_to_ptr.vmem [resolvable:$true] %s25
      %31 = dma.hbm_to_vmem [thread:$0]  %s24, 128, %s26, [#allocation3], 64, 64, 4
    $region5: #{tpu_custom_call.1} parent=1 // pred_fallthru
      _
    // Predicated region
    $region6: #{tpu_custom_call.1} parent=1 // pred_check
      _
    $region7: #{tpu_custom_call.1} parent=1 // pred_check_branch
      %33 = sbr.rel (0) target = $region9
    $region8: #{tpu_custom_call.1} parent=1 // pred_region
      %35 = vsyncadd [#allocation5], 0
      %s36 = sshll.u32 %s1, 4
      %s37 = int_to_ptr.hbm [resolvable:$true] %s36
      %s38 = sshll.u32 [#allocation4], 4
      %s39 = int_to_ptr.vmem [resolvable:$true] %s38
      %44 = dma.hbm_to_vmem [thread:$0]  %s37, 128, %s39, [#allocation5], 64, 64, 4
    $region9: #{tpu_custom_call.1} parent=1 // pred_fallthru
      _
    // Predicated region
    $region10: #{tpu_custom_call.1} parent=1 // pred_check
      _
    $region11: #{tpu_custom_call.1} parent=1 // pred_check_branch
      %46 = sbr.rel (0) target = $region13
    $region12: #{tpu_custom_call.1} parent=1 // pred_region
      %48 = vsyncadd [#allocation5], 0
      %s49 = sshll.u32 %s2, 4
      %s50 = int_to_ptr.hbm [resolvable:$true] %s49
      %s51 = sshll.u32 [#allocation6], 4
      %s52 = int_to_ptr.vmem [resolvable:$true] %s51
      %57 = dma.hbm_to_vmem [thread:$0]  %s50, 512, %s52, [#allocation5], 128, 128, 8
    $region13: #{tpu_custom_call.1} parent=1 // pred_fallthru
      _
    // Predicated region
    $region14: #{tpu_custom_call.1} parent=1 // pred_check
      _
    $region15: #{tpu_custom_call.1} parent=1 // pred_check_branch
      %59 = sbr.rel (0) target = $region17
    $region16: #{tpu_custom_call.1} parent=1 // pred_region
      %61 = vsyncadd [#allocation8], 0
      %s62 = sshll.u32 %s3, 4
      %s63 = int_to_ptr.hbm [resolvable:$true] %s62
      %s64 = sshll.u32 [#allocation7], 4
      %s65 = int_to_ptr.vmem [resolvable:$true] %s64
      %70 = dma.hbm_to_vmem [thread:$0]  %s63, 1024, %s65, [#allocation8], 128, 128, 8
    $region17: #{tpu_custom_call.1} parent=1 // pred_fallthru
      _
    // Predicated region
    $region18: #{tpu_custom_call.1} parent=1 // pred_check
      _
    $region19: #{tpu_custom_call.1} parent=1 // pred_check_branch
      %72 = sbr.rel (0) target = $region21
    $region20: #{tpu_custom_call.1} parent=1 // pred_region
      %74 = vsyncadd [#allocation8], 0
      %s75 = sshll.u32 %s4, 4
      %s76 = int_to_ptr.hbm [resolvable:$true] %s75
      %s77 = sshll.u32 [#allocation9], 4
      %s78 = int_to_ptr.vmem [resolvable:$true] %s77
      %83 = dma.hbm_to_vmem [thread:$0]  %s76, 1024, %s78, [#allocation8], 64, 64, 4
    $region21: #{tpu_custom_call.1} parent=1 // pred_fallthru
      _
    // Predicated region
    $region22: #{tpu_custom_call.1} parent=1 // pred_check
      _
    $region23: #{tpu_custom_call.1} parent=1 // pred_check_branch
      %85 = sbr.rel (0) target = $region25
    $region24: #{tpu_custom_call.1} parent=1 // pred_region
      %87 = vsyncadd [#allocation11], 0
      %s88 = sshll.u32 %s5, 4
      %s89 = int_to_ptr.hbm [resolvable:$true] %s88
      %s90 = sshll.u32 [#allocation10], 4
      %s91 = int_to_ptr.vmem [resolvable:$true] %s90
      %96 = dma.hbm_to_vmem [thread:$0]  %s89, 2048, %s91, [#allocation11], 128, 128, 8
    $region25: #{tpu_custom_call.1} parent=1 // pred_fallthru
      _
    // Predicated region
    $region26: #{tpu_custom_call.1} parent=1 // pred_check
      _
    $region27: #{tpu_custom_call.1} parent=1 // pred_check_branch
      %98 = sbr.rel (0) target = $region29
    $region28: #{tpu_custom_call.1} parent=1 // pred_region
      _
    $region29: #{tpu_custom_call.1} parent=1 // pred_fallthru
      _
    // Predicated region
    $region30: #{tpu_custom_call.1} parent=1 // pred_check
      _
    $region31: #{tpu_custom_call.1} parent=1 // pred_check_branch
      %100 = sbr.rel (0) target = $region33
    $region32: #{tpu_custom_call.1} parent=1 // pred_region
      _
    $region33: #{tpu_custom_call.1} parent=1 // pred_fallthru
      _
    // Predicated region
    $region34: #{tpu_custom_call.1} parent=1 // pred_check
      _
    $region35: #{tpu_custom_call.1} parent=1 // pred_check_branch
      %102 = sbr.rel (0) target = $region37
    $region36: #{tpu_custom_call.1} parent=1 // pred_region
      _
    $region37: #{tpu_custom_call.1} parent=1 // pred_fallthru
      _
    // Predicated region
    $region38: #{tpu_custom_call.1} parent=1 // pred_check
      _
    $region39: #{tpu_custom_call.1} parent=1 // pred_check_branch
      %104 = sbr.rel (0) target = $region41
    $region40: #{tpu_custom_call.1} parent=1 // pred_region
      _
    $region41: #{tpu_custom_call.1} parent=1 // pred_fallthru
      _
    // Predicated region
    $region42: #{tpu_custom_call.1} parent=1 // pred_check
      _
    $region43: #{tpu_custom_call.1} parent=1 // pred_check_branch
      %106 = sbr.rel (0) target = $region45
    $region44: #{tpu_custom_call.1} parent=1 // pred_region
      %108 = dma.done [#allocation3], 128
    $region45: #{tpu_custom_call.1} parent=1 // pred_fallthru
      _
    // Predicated region
    $region46: #{tpu_custom_call.1} parent=1 // pred_check
      _
    $region47: #{tpu_custom_call.1} parent=1 // pred_check_branch
      %110 = sbr.rel (0) target = $region49
    $region48: #{tpu_custom_call.1} parent=1 // pred_region
      %112 = dma.done [#allocation5], 128
    $region49: #{tpu_custom_call.1} parent=1 // pred_fallthru
      _
    // Predicated region
    $region50: #{tpu_custom_call.1} parent=1 // pred_check
      _
    $region51: #{tpu_custom_call.1} parent=1 // pred_check_branch
      %114 = sbr.rel (0) target = $region53
    $region52: #{tpu_custom_call.1} parent=1 // pred_region
      %116 = dma.done [#allocation5], 512
    $region53: #{tpu_custom_call.1} parent=1 // pred_fallthru
      _
    // Predicated region
    $region54: #{tpu_custom_call.1} parent=1 // pred_check
      _
    $region55: #{tpu_custom_call.1} parent=1 // pred_check_branch
      %118 = sbr.rel (0) target = $region57
    $region56: #{tpu_custom_call.1} parent=1 // pred_region
      %120 = dma.done [#allocation8], 1024
    $region57: #{tpu_custom_call.1} parent=1 // pred_fallthru
      _
    // Predicated region
    $region58: #{tpu_custom_call.1} parent=1 // pred_check
      _
    $region59: #{tpu_custom_call.1} parent=1 // pred_check_branch
      %122 = sbr.rel (0) target = $region61
    $region60: #{tpu_custom_call.1} parent=1 // pred_region
      %124 = dma.done [#allocation8], 1024
    $region61: #{tpu_custom_call.1} parent=1 // pred_fallthru
      _
    // Predicated region
    $region62: #{tpu_custom_call.1} parent=1 // pred_check
      _
    $region63: #{tpu_custom_call.1} parent=1 // pred_check_branch
      %126 = sbr.rel (0) target = $region65
    $region64: #{tpu_custom_call.1} parent=1 // pred_region
      %128 = dma.done [#allocation11], 2048
    $region65: #{tpu_custom_call.1} parent=1 // pred_fallthru
      _
    %v130 = vld [vmem:[#allocation2] sm:$0xf]
    %v131 = vld [vmem:[#allocation2 + $0x4] sm:$0xf]
    %v132 = vld [vmem:[#allocation6] sm:$0xff]
    %v133 = vld [vmem:[#allocation6 + $0x8] sm:$0xff]
    %v134 = vld [vmem:[#allocation6 + $0x10] sm:$0xff]
    %v135 = vld [vmem:[#allocation6 + $0x18] sm:$0xff]
    %v136 = vld [vmem:[#allocation4] sm:$0xf]
    %v137 = vld [vmem:[#allocation4 + $0x4] sm:$0xf]
    %v138 = vld [vmem:[#allocation7] sm:$0xff]
    %v139 = vld [vmem:[#allocation7 + $0x8] sm:$0xff]
    %v140 = vld [vmem:[#allocation7 + $0x10] sm:$0xff]
    %v141 = vld [vmem:[#allocation7 + $0x18] sm:$0xff]
    %v142 = vld [vmem:[#allocation7 + $0x20] sm:$0xff]
    %v143 = vld [vmem:[#allocation7 + $0x28] sm:$0xff]
    %v144 = vld [vmem:[#allocation7 + $0x30] sm:$0xff]
    %v145 = vld [vmem:[#allocation7 + $0x38] sm:$0xff]
    %v148 = vunpack.c.l.b16 %v136
    %v149 = vunpack.c.l.b16 %v137
    %v150 = vpack.c.b16 %v149, %v148
    %v159 = vunpack.c.l.b16 %v138
    %v160 = vunpack.c.h.b16 %v138
    %v161 = vunpack.c.l.b16 %v139
    %v162 = vunpack.c.h.b16 %v139
    %v163 = vunpack.c.l.b16 %v140
    %v164 = vunpack.c.h.b16 %v140
    %v165 = vunpack.c.l.b16 %v141
    %v166 = vunpack.c.h.b16 %v141
    %v167 = vunpack.c.l.b16 %v142
    %v168 = vunpack.c.h.b16 %v142
    %v169 = vunpack.c.l.b16 %v143
    %v170 = vunpack.c.h.b16 %v143
    %v171 = vunpack.c.l.b16 %v144
    %v172 = vunpack.c.h.b16 %v144
    %v173 = vunpack.c.l.b16 %v145
    %v174 = vunpack.c.h.b16 %v145
    %v175 = vpack.c.b16 %v161, %v159
    %v176 = vpack.c.b16 %v162, %v160
    %v177 = vpack.c.b16 %v165, %v163
    %v178 = vpack.c.b16 %v166, %v164
    %v179 = vpack.c.b16 %v169, %v167
    %v180 = vpack.c.b16 %v170, %v168
    %v181 = vpack.c.b16 %v173, %v171
    %v182 = vpack.c.b16 %v174, %v172
    %vm191 = vcmask 523264
    %v193 = vsel %vm191, %v150, 0
    %195 = vmatpush.bf16.msra.mxu0 0
    %196 = vmatpush.bf16.msra.mxu0 0
    %197 = vmatpush.bf16.msra.mxu0 0
    %198 = vmatpush.bf16.msra.mxu0 0
    %199 = vmatpush.bf16.msra.mxu0 %v181
    %200 = vmatpush.bf16.msra.mxu0 %v179
    %201 = vmatpush.bf16.msra.mxu0 %v177
    %202 = vmatpush.bf16.msra.mxu0 %v175
    %203 = vmatmul.bf16.gmra.mxu0 %v193
    %v204 = vpop.f32.mrf.mxu0
    %v205 = vadd.f32 0.0, %v204
    %v206 = vpop.f32.mrf.mxu0
    %v207 = vadd.f32 0.0, %v206
    %208 = vdwg.mxu0
    %209 = vmatpush.bf16.msra.mxu0 0
    %210 = vmatpush.bf16.msra.mxu0 0
    %211 = vmatpush.bf16.msra.mxu0 0
    %212 = vmatpush.bf16.msra.mxu0 0
    %213 = vmatpush.bf16.msra.mxu0 %v182
    %214 = vmatpush.bf16.msra.mxu0 %v180
    %215 = vmatpush.bf16.msra.mxu0 %v178
    %216 = vmatpush.bf16.msra.mxu0 %v176
    %217 = vmatmul.bf16.gmra.mxu0 %v193
    %v218 = vpop.f32.mrf.mxu0
    %v219 = vadd.f32 0.0, %v218
    %v220 = vpop.f32.mrf.mxu0
    %v221 = vadd.f32 0.0, %v220
    %222 = vdwg.mxu0
    %v225 = vunpack.c.l.b16 %v130
    %v226 = vunpack.c.l.b16 %v131
    %v227 = vpack.c.b16 %v226, %v225
    %v232 = vunpack.c.l.b16 %v132
    %v233 = vunpack.c.h.b16 %v132
    %v234 = vunpack.c.l.b16 %v133
    %v235 = vunpack.c.h.b16 %v133
    %v236 = vunpack.c.l.b16 %v134
    %v237 = vunpack.c.h.b16 %v134
    %v238 = vunpack.c.l.b16 %v135
    %v239 = vunpack.c.h.b16 %v135
    %v240 = vpack.c.b16 %v234, %v232
    %v241 = vpack.c.b16 %v235, %v233
    %v242 = vpack.c.b16 %v238, %v236
    %v243 = vpack.c.b16 %v239, %v237
    %vm248 = vcmask 261120
    %v250 = vsel %vm248, %v227, 0
    %252 = vmatpush.bf16.msra.mxu0 0
    %253 = vmatpush.bf16.msra.mxu0 0
    %254 = vmatpush.bf16.msra.mxu0 0
    %255 = vmatpush.bf16.msra.mxu0 0
    %256 = vmatpush.bf16.msra.mxu0 0
    %257 = vmatpush.bf16.msra.mxu0 0
    %258 = vmatpush.bf16.msra.mxu0 %v242
    %259 = vmatpush.bf16.msra.mxu0 %v240
    %260 = vmatmul.bf16.gmra.mxu0 %v250
    %v261 = vpop.f32.mrf.mxu0
    %v262 = vadd.f32 %v205, %v261
    %v263 = vpop.f32.mrf.mxu0
    %v264 = vadd.f32 %v207, %v263
    %265 = vdwg.mxu0
    %266 = vmatpush.bf16.msra.mxu0 0
    %267 = vmatpush.bf16.msra.mxu0 0
    %268 = vmatpush.bf16.msra.mxu0 0
    %269 = vmatpush.bf16.msra.mxu0 0
    %270 = vmatpush.bf16.msra.mxu0 0
    %271 = vmatpush.bf16.msra.mxu0 0
    %272 = vmatpush.bf16.msra.mxu0 %v243
    %273 = vmatpush.bf16.msra.mxu0 %v241
    %274 = vmatmul.bf16.gmra.mxu0 %v250
    %v275 = vpop.f32.mrf.mxu0
    %v276 = vadd.f32 %v219, %v275
    %v277 = vpop.f32.mrf.mxu0
    %v278 = vadd.f32 %v221, %v277
    %279 = vdwg.mxu0
    %v280 = vld [vmem:[%s6] sm:$0x1]
    %v282 = vperm.slane %v280, 0
    %v284 = vadd.f32 %v262, %v282
    %v285 = vadd.f32 %v264, %v282
    %vm286 = vcmp.gt.f32.partialorder %v284, 0.0
    %vm287 = vcmp.gt.f32.partialorder %v285, 0.0
    %v288 = vld [vmem:[%s9] sm:$0x1]
    %v290 = vperm.slane %v288, 0
    %v292 = vmul.f32 %v290, %v284
    %v293 = vmul.f32 %v290, %v285
    %v294 = vsel %vm286, %v284, %v292
    %v295 = vsel %vm287, %v285, %v293
    %v296 = vpack.c.bf16 %v295, %v294
    %v297 = vld [vmem:[#allocation9] sm:$0xf]
    %v298 = vld [vmem:[#allocation9 + $0x4] sm:$0xf]
    %v299 = vld [vmem:[#allocation9 + $0x8] sm:$0xf]
    %v300 = vld [vmem:[#allocation9 + $0xc] sm:$0xf]
    %v301 = vld [vmem:[#allocation9 + $0x10] sm:$0xf]
    %v302 = vld [vmem:[#allocation9 + $0x14] sm:$0xf]
    %v303 = vld [vmem:[#allocation9 + $0x18] sm:$0xf]
    %v304 = vld [vmem:[#allocation9 + $0x1c] sm:$0xf]
    %v305 = vld [vmem:[#allocation9 + $0x20] sm:$0xf]
    %v306 = vld [vmem:[#allocation9 + $0x24] sm:$0xf]
    %v307 = vld [vmem:[#allocation9 + $0x28] sm:$0xf]
    %v308 = vld [vmem:[#allocation9 + $0x2c] sm:$0xf]
    %v309 = vld [vmem:[#allocation9 + $0x30] sm:$0xf]
    %v310 = vld [vmem:[#allocation9 + $0x34] sm:$0xf]
    %v311 = vld [vmem:[#allocation9 + $0x38] sm:$0xf]
    %v312 = vld [vmem:[#allocation9 + $0x3c] sm:$0xf]
    %v329 = vunpack.c.l.b16 %v297
    %v330 = vunpack.c.l.b16 %v298
    %v331 = vunpack.c.l.b16 %v299
    %v332 = vunpack.c.l.b16 %v300
    %v333 = vunpack.c.l.b16 %v301
    %v334 = vunpack.c.l.b16 %v302
    %v335 = vunpack.c.l.b16 %v303
    %v336 = vunpack.c.l.b16 %v304
    %v337 = vunpack.c.l.b16 %v305
    %v338 = vunpack.c.l.b16 %v306
    %v339 = vunpack.c.l.b16 %v307
    %v340 = vunpack.c.l.b16 %v308
    %v341 = vunpack.c.l.b16 %v309
    %v342 = vunpack.c.l.b16 %v310
    %v343 = vunpack.c.l.b16 %v311
    %v344 = vunpack.c.l.b16 %v312
    %v345 = vpack.c.b16 %v330, %v329
    %v346 = vpack.c.b16 %v332, %v331
    %v347 = vpack.c.b16 %v334, %v333
    %v348 = vpack.c.b16 %v336, %v335
    %v349 = vpack.c.b16 %v338, %v337
    %v350 = vpack.c.b16 %v340, %v339
    %v351 = vpack.c.b16 %v342, %v341
    %v352 = vpack.c.b16 %v344, %v343
    %361 = vmatpush.bf16.msra.mxu0 %v352
    %362 = vmatpush.bf16.msra.mxu0 %v351
    %363 = vmatpush.bf16.msra.mxu0 %v350
    %364 = vmatpush.bf16.msra.mxu0 %v349
    %365 = vmatpush.bf16.msra.mxu0 %v348
    %366 = vmatpush.bf16.msra.mxu0 %v347
    %367 = vmatpush.bf16.msra.mxu0 %v346
    %368 = vmatpush.bf16.msra.mxu0 %v345
    %369 = vmatmul.bf16.gmra.mxu0 %v296
    %v370 = vpop.f32.mrf.mxu0
    %v371 = vadd.f32 %v276, %v370
    %v372 = vpop.f32.mrf.mxu0
    %v373 = vadd.f32 %v278, %v372
    %374 = vdwg.mxu0
    %v375 = vld [vmem:[%s7] sm:$0x1]
    %v377 = vperm.slane %v375, 0
    %v379 = vadd.f32 %v371, %v377
    %v380 = vadd.f32 %v373, %v377
    %v381 = vxor.u32 %v379, 2147483648
    %v382 = vxor.u32 %v380, 2147483648
    %v383 = vmul.f32 %v381, 1.442695
    %v384 = vpow.pop %v383
    %v385 = vmul.f32 %v382, 1.442695
    %v386 = vpow.pop %v385
    %v387 = vadd.f32 %v384, 1.0
    %v388 = vadd.f32 %v386, 1.0
    %v389 = vrcp.pop %v387
    %v390 = vmul.f32 %v387, %v389
    %v391 = vsub.f32 1.0, %v390
    %v392 = vmul.f32 %v389, %v391
    %v393 = vadd.f32 %v389, %v392
    %vm394 = vweird.f32 %v387
    %vm395 = vweird.f32 %v389
    %vm396 = vmor %vm394, %vm395
    %v397 = vsel %vm396, %v389, %v393
    %v398 = vand.u32 2147483647, %v387
    %vm399 = vcmp.eq.f32.partialorder %v398, 8.507059e+37
    %v400 = vand.u32 %v387, 2147483648
    %v401 = vor.u32 1.1754944e-38, %v400
    %v402 = vsel %vm399, %v401, %v397
    %v403 = vmul.f32 1.0, %v402
    %v404 = vrcp.pop %v388
    %v405 = vmul.f32 %v388, %v404
    %v406 = vsub.f32 1.0, %v405
    %v407 = vmul.f32 %v404, %v406
    %v408 = vadd.f32 %v404, %v407
    %vm409 = vweird.f32 %v388
    %vm410 = vweird.f32 %v404
    %vm411 = vmor %vm409, %vm410
    %v412 = vsel %vm411, %v404, %v408
    %v413 = vand.u32 2147483647, %v388
    %vm414 = vcmp.eq.f32.partialorder %v413, 8.507059e+37
    %v415 = vand.u32 %v388, 2147483648
    %v416 = vor.u32 1.1754944e-38, %v415
    %v417 = vsel %vm414, %v416, %v412
    %v418 = vmul.f32 1.0, %v417
    %v419 = vlaneseq
    %v420 = vand.u32 %v419, 127
    %vm421 = vcmp.ge.s32.totalorder %v420, 64
    %vm422 = vcmp.lt.s32.totalorder %v420, 88
    %vm423 = vmand %vm421, %vm422
    %v424 = vmul.f32 %v403, 1.442695
    %v425 = vpow.pop %v424
    %v426 = vmul.f32 %v418, 1.442695
    %v427 = vpow.pop %v426
    %v428 = vsel %vm423, %v425, 0.0
    %v429 = vsel %vm423, %v427, 0.0
    %430 = vadd.xlane.f32.xlu0 %v428
    %v431 = vpop.xlane.xlu0 %430
    %432 = vadd.xlane.f32.xlu0 %v429
    %v433 = vpop.xlane.xlu0 %432
    %v434 = vrcp.pop %v431
    %v435 = vrcp.pop %v433
    %v436 = vmul.f32 %v434, 8.0
    %v437 = vmul.f32 %v435, 8.0
    %v438 = vmul.f32 %v428, %v436
    %v439 = vmul.f32 %v429, %v437
    %440 = vrot.lane.b32.xlu0 %v438, 64
    %v441 = vpop.permute.xlu0 %440
    %442 = vrot.lane.b32.xlu0 %v439, 64
    %v443 = vpop.permute.xlu0 %442
    %v444 = vmul.f32 %v276, %v441
    %v445 = vmul.f32 %v278, %v443
    %v446 = vld [vmem:[#allocation10] sm:$0xff]
    %v447 = vld [vmem:[#allocation10 + $0x8] sm:$0xff]
    %v448 = vld [vmem:[#allocation10 + $0x10] sm:$0xff]
    %v449 = vld [vmem:[#allocation10 + $0x18] sm:$0xff]
    %v450 = vld [vmem:[#allocation10 + $0x20] sm:$0xff]
    %v451 = vld [vmem:[#allocation10 + $0x28] sm:$0xff]
    %v452 = vld [vmem:[#allocation10 + $0x30] sm:$0xff]
    %v453 = vld [vmem:[#allocation10 + $0x38] sm:$0xff]
    %v454 = vld [vmem:[#allocation10 + $0x40] sm:$0xff]
    %v455 = vld [vmem:[#allocation10 + $0x48] sm:$0xff]
    %v456 = vld [vmem:[#allocation10 + $0x50] sm:$0xff]
    %v457 = vld [vmem:[#allocation10 + $0x58] sm:$0xff]
    %v458 = vld [vmem:[#allocation10 + $0x60] sm:$0xff]
    %v459 = vld [vmem:[#allocation10 + $0x68] sm:$0xff]
    %v460 = vld [vmem:[#allocation10 + $0x70] sm:$0xff]
    %v461 = vld [vmem:[#allocation10 + $0x78] sm:$0xff]
    %v462 = vld [vmem:[%s8] sm:$0x1]
    %v464 = vperm.slane %v462, 0
    %466 = vmatpush.msra.mxu0 %v461
    %467 = vmatpush.msra.mxu0 %v460
    %468 = vmatpush.msra.mxu0 %v459
    %469 = vmatpush.msra.mxu0 %v458
    %470 = vmatpush.msra.mxu0 %v457
    %471 = vmatpush.msra.mxu0 %v456
    %472 = vmatpush.msra.mxu0 %v455
    %473 = vmatpush.msra.mxu0 %v454
    %474 = vmatpush.msra.mxu0 %v453
    %475 = vmatpush.msra.mxu0 %v452
    %476 = vmatpush.msra.mxu0 %v451
    %477 = vmatpush.msra.mxu0 %v450
    %478 = vmatpush.msra.mxu0 %v449
    %479 = vmatpush.msra.mxu0 %v448
    %480 = vmatpush.msra.mxu0 %v447
    %481 = vmatpush.msra.mxu0 %v446
    %482 = vmatmul.f32.gmra.mxu0 %v444
    %v483 = vpop.f32.mrf.mxu0
    %v484 = vadd.f32 %v464, %v483
    %485 = vmatmul.f32.gmra.mxu0 %v445
    %v486 = vpop.f32.mrf.mxu0
    %v487 = vadd.f32 %v464, %v486
    %488 = vdwg.mxu0
    %vm489 = vcmask 64512
    %490 = vst.msk [vmem:[%s10] sm:$0xff] %vm489, %v484
    %491 = vst.msk [vmem:[%s10 + $0x8] sm:$0xff] %vm489, %v487
    // Predicated region
    $region66: #{tpu_custom_call.1} parent=1 // pred_check
      _
    $region67: #{tpu_custom_call.1} parent=1 // pred_check_branch
      %493 = sbr.rel (0) target = $region69
    $region68: #{tpu_custom_call.1} parent=1 // pred_region
      _
    $region69: #{tpu_custom_call.1} parent=1 // pred_fallthru
      _
    // Predicated region
    $region70: #{tpu_custom_call.1} parent=1 // pred_check
      _
    $region71: #{tpu_custom_call.1} parent=1 // pred_check_branch
      %495 = sbr.rel (0) target = $region73
    $region72: #{tpu_custom_call.1} parent=1 // pred_region
      _
    $region73: #{tpu_custom_call.1} parent=1 // pred_fallthru
      _
    %496 = vsyncpa [#allocation3], 1
    %497 = vsyncpa [#allocation5], 1
    %498 = vsyncpa [#allocation8], 1
    %499 = vsyncpa [#allocation11], 1

</llo_original>
